<compile_context>
chip_gen: v6e
topology: v6e:2x2x1
jax: 0.10.0
libtpu: 0.0.40
codegen_flags: <defaults>
</compile_context>

<pallas_src>
import jax
import jax.numpy as jnp
import numpy as np
from jax.experimental import pallas as pl
from jax.experimental.pallas import tpu as pltpu

NUM_TREAT = 3
NUM_EXP = 4
UNITS_EXP = 4            # units_exp == units_tower
NUM_FEATURES = 32        # len(Xlow_cols)
BATCH = 16
MAX_TILE_N = 4096        # large-batch row tile (review: 2048-8192)

TE = NUM_TREAT * NUM_EXP          # 12  gate-logit / mixture width
TU = NUM_TREAT * UNITS_EXP        # 12  concatenated tower width
PROJ_W = NUM_EXP + TE             # 16  fused x-projection width (experts + T gates)
W2_COLS = TU + UNITS_EXP          # 16  fused tower width ([block-diag HT | HY/T])


def _align8(v):
    return ((v + 7) // 8) * 8


# ---- Packed-parameter row layout: one (PP_ROWS, PP_COLS) f32 array, one DMA ----
ROW_WALL = 0                                   # rows [0, 32)  : fused x-projection (F, PROJ_W)
ROW_W2 = _align8(ROW_WALL + NUM_FEATURES)      # rows [32, 44) : [block-diag HT | HY/T] (TE, W2_COLS)
ROW_PW = _align8(ROW_W2 + TE)                  # rows [48, 60) : propensity block (TU, T)
ROW_B2 = _align8(ROW_PW + TU)                  # row 64        : tower bias row (1, W2_COLS)
ROW_EOB = ROW_B2 + 1                           # row 65 [:E]   : expert-output bias
ROW_PB = ROW_EOB + 1                           # row 66 [:T]   : propensity bias
ROW_OYP = ROW_PB + 1                           # row 67 [:T]   : outcomeY (propensity part)
ROW_OYH = ROW_OYP + 1                          # row 68 [:U]   : outcomeY (HY part)
PP_ROWS = _align8(ROW_OYH + 1)                 # 72
PP_COLS = max(PROJ_W, W2_COLS)                 # 16


def m3e2_kernel(x_ref, pp_ref, out_ref):
    x = x_ref[...]                                                       # (tn, F)

    # ---- One fused x-projection: [expert cols | T gate-logit groups] ----
    w_all = pp_ref[ROW_WALL:ROW_WALL + NUM_FEATURES, 0:PROJ_W]           # (F, E+T*E)
    z = jnp.dot(x, w_all, preferred_element_type=jnp.float32)            # (tn, E+T*E)

    # ---- Experts: relu(x @ W_eff + b); W_eff[:, i] = ek[i] @ eow[i] (exact fusion) ----
    eob = pp_ref[ROW_EOB:ROW_EOB + 1, 0:NUM_EXP]                         # (1, E)
    experts = jnp.maximum(z[:, 0:NUM_EXP] + eob, 0.0)                    # (tn, E)

    # ---- Gates: per-treatment softmax; one shared shift + a single exp pass ----
    gl = z[:, NUM_EXP:NUM_EXP + TE]                                      # (tn, T*E)
    gl = gl - jnp.max(gl, axis=-1, keepdims=True)
    eg = jnp.exp(gl)
    mixed_parts = []
    for t in range(NUM_TREAT):
        et = eg[:, t * NUM_EXP:(t + 1) * NUM_EXP]                        # (tn, E)
        gt = et / jnp.sum(et, axis=-1, keepdims=True)                    # softmax group t
        mixed_parts.append(gt * experts)                                 # gate_t * experts
    mixed = jnp.concatenate(mixed_parts, axis=1)                         # (tn, T*E)

    # ---- Towers, fused: one block-diagonal matmul producing [HT_0|HT_1|HT_2 | HY/T] ----
    w2 = pp_ref[ROW_W2:ROW_W2 + TE, 0:W2_COLS]                           # (T*E, T*U + U)
    b2 = pp_ref[ROW_B2:ROW_B2 + 1, 0:W2_COLS]                            # (1,   T*U + U)
    zz = jnp.dot(mixed, w2, preferred_element_type=jnp.float32) + b2     # (tn,  T*U + U)
    ht_all = zz[:, 0:TU]                                                 # (tn, T*U)
    hy = zz[:, TU:TU + UNITS_EXP]                                        # (tn, U) == HY / num_treat

    # ---- Propensity heads, fused into one (T*U, T) block matmul ----
    th = jnp.tanh(ht_all)                                                # (tn, T*U)
    pw_b = pp_ref[ROW_PW:ROW_PW + TU, 0:NUM_TREAT]                       # (T*U, T)
    pb = pp_ref[ROW_PB:ROW_PB + 1, 0:NUM_TREAT]                          # (1, T)
    p = jnp.dot(th, pw_b, preferred_element_type=jnp.float32) + pb       # (tn, T)

    # ---- Outcome head: relu([p, HY/T]) @ outcomeY, split as two lane reductions ----
    oyp = pp_ref[ROW_OYP:ROW_OYP + 1, 0:NUM_TREAT]                       # (1, T)
    oyh = pp_ref[ROW_OYH:ROW_OYH + 1, 0:UNITS_EXP]                       # (1, U)
    out_y = (jnp.sum(jnp.maximum(p, 0.0) * oyp, axis=-1, keepdims=True)
             + jnp.sum(jnp.maximum(hy, 0.0) * oyh, axis=-1, keepdims=True))  # (tn, 1)

    # ---- Single lane-dense store of the whole (tn, T+1) result tile ----
    out_ref[...] = jnp.concatenate([p, out_y], axis=1)


def pack_params(params):
    """Pack all (tiny) parameters into one (PP_ROWS, PP_COLS) f32 array (1 DMA)."""
    ek, eow, eob, gk, btreat, htw, htb, pw, pb, outy = params

    # Fused expert weight: column i = ek[i] @ eow[i]                    (F, E)
    w_eff = jnp.einsum('efu,euo->fe', ek, eow)
    # Gate kernels flattened so column block t holds gk[t]              (F, T*E)
    gk_flat = jnp.transpose(gk, (1, 0, 2)).reshape(NUM_FEATURES, TE)
    w_all = jnp.concatenate([w_eff, gk_flat], axis=1)                   # (F, PROJ_W)

    # bias_treat folded into the tower bias (exact: scalar added to every expert lane).
    htb_eff = htb + btreat * jnp.sum(htw, axis=1)                       # (T, U)

    # Block-diagonal tower weight + the HY/num_treat column block.
    w_tower = jnp.zeros((TE, TU), jnp.float32)
    for t in range(NUM_TREAT):
        w_tower = w_tower.at[t * NUM_EXP:(t + 1) * NUM_EXP,
                             t * UNITS_EXP:(t + 1) * UNITS_EXP].set(htw[t])
    w_hy = htw.reshape(TE, UNITS_EXP) / float(NUM_TREAT)                # (T*E, U)
    b_hy = jnp.sum(htb_eff, axis=0, keepdims=True) / float(NUM_TREAT)   # (1, U)
    w2 = jnp.concatenate([w_tower, w_hy], axis=1)                       # (T*E, W2_COLS)
    b2 = jnp.concatenate([htb_eff.reshape(1, TU), b_hy], axis=1)        # (1, W2_COLS)

    # Propensity heads as one (T*U, T) block matrix.
    pw_block = jnp.zeros((TU, NUM_TREAT), jnp.float32)
    for t in range(NUM_TREAT):
        pw_block = pw_block.at[t * UNITS_EXP:(t + 1) * UNITS_EXP, t].set(pw[t, :, 0])

    pp = jnp.zeros((PP_ROWS, PP_COLS), jnp.float32)
    pp = pp.at[ROW_WALL:ROW_WALL + NUM_FEATURES, 0:PROJ_W].set(w_all)
    pp = pp.at[ROW_W2:ROW_W2 + TE, 0:W2_COLS].set(w2)
    pp = pp.at[ROW_PW:ROW_PW + TU, 0:NUM_TREAT].set(pw_block)
    pp = pp.at[ROW_B2, 0:W2_COLS].set(b2[0])
    pp = pp.at[ROW_EOB, 0:NUM_EXP].set(eob[:, 0])
    pp = pp.at[ROW_PB, 0:NUM_TREAT].set(pb[:, 0])
    pp = pp.at[ROW_OYP, 0:NUM_TREAT].set(outy[:NUM_TREAT, 0])
    pp = pp.at[ROW_OYH, 0:UNITS_EXP].set(outy[NUM_TREAT:, 0])
    return pp


def _select_tile_n(n, max_tile):
    """Row-tile selection.

    Tiny batches run as a single grid step (per-step overhead dominates anyway).
    Larger batches use the largest multiple-of-8 divisor of n that is <= max_tile
    AND leaves >= 2 grid steps, so both v7x TensorCores get work via "parallel".
    """
    if n <= 512 or n % 8 != 0:
        return n
    start = min(max_tile, n // 2)
    start -= start % 8
    for t in range(start, 0, -8):
        if n % t == 0:
            return t
    return n


def m3e2_forward(x, params, *, max_tile_n=MAX_TILE_N):
    pp = pack_params(params)
    n = x.shape[0]
    tile_n = _select_tile_n(n, max_tile_n)
    grid = (n // tile_n,)

    in_specs = [
        pl.BlockSpec((tile_n, NUM_FEATURES), lambda i: (i, 0)),     # x rows
        pl.BlockSpec((PP_ROWS, PP_COLS), lambda i: (0, 0)),         # packed params (1 DMA)
    ]
    out_spec = pl.BlockSpec((tile_n, NUM_TREAT + 1), lambda i: (i, 0))

    out = pl.pallas_call(
        m3e2_kernel,
        out_shape=jax.ShapeDtypeStruct((n, NUM_TREAT + 1), jnp.float32),
        grid_spec=pltpu.PrefetchScalarGridSpec(
            num_scalar_prefetch=0,
            grid=grid,
            in_specs=in_specs,
            out_specs=out_spec,
        ),
        compiler_params=pltpu.CompilerParams(
            dimension_semantics=("parallel",),
            vmem_limit_bytes=32 * 1024 * 1024,   # headroom for big tiles (v5e default is 16 MiB)
        ),
    )(x, pp)
    # PyTorch forward returns (output, None) when Xhigh_cols is None.
    return out, None


def m3e2_reference(x, params):
    """Pure-JAX mirror of the PyTorch forward (for correctness check)."""
    ek, eow, eob, gk, btreat, htw, htb, pw, pb, outy = params
    n = x.shape[0]
    cols = []
    for i in range(NUM_EXP):
        aux = x @ ek[i]
        cols.append(aux @ eow[i] + eob[i, 0])
    expert_outputs = jnp.maximum(jnp.concatenate(cols, axis=1), 0.0)
    gates = [jax.nn.softmax(x @ gk[t], axis=-1) for t in range(NUM_TREAT)]
    hy = jnp.zeros((n, UNITS_EXP), jnp.float32)
    prop = []
    for t in range(NUM_TREAT):
        out_t = gates[t] * expert_outputs + btreat[t, 0]
        ht = out_t @ htw[t] + htb[t]
        hy = hy + ht
        prop.append(jnp.tanh(ht) @ pw[t] + pb[t, 0])
    output = jnp.concatenate(prop, axis=1)
    hy = hy / float(NUM_TREAT)
    aux = jnp.maximum(jnp.concatenate([output, hy], axis=1), 0.0)
    out_y = aux @ outy
    return jnp.concatenate([output, out_y], axis=1)


if __name__ == "__main__":
    key = jax.random.PRNGKey(0)
    ks = jax.random.split(key, 12)
    x = jax.random.normal(ks[0], (BATCH, NUM_FEATURES), jnp.float32)

    # Deterministic parameter init (shapes match the PyTorch __init__).
    ek = jax.random.uniform(ks[1], (NUM_EXP, NUM_FEATURES, UNITS_EXP), jnp.float32)      # torch.rand
    eow = jax.random.uniform(ks[2], (NUM_EXP, UNITS_EXP, 1), jnp.float32, -0.5, 0.5)     # Linear(U,1).weight^T
    eob = jax.random.uniform(ks[3], (NUM_EXP, 1), jnp.float32, -0.5, 0.5)                # Linear(U,1).bias
    gk = jax.random.uniform(ks[4], (NUM_TREAT, NUM_FEATURES, NUM_EXP), jnp.float32)      # torch.rand
    btreat = jnp.zeros((NUM_TREAT, 1), jnp.float32)                                      # bias_treat = zeros
    htw = jax.random.uniform(ks[5], (NUM_TREAT, NUM_EXP, UNITS_EXP), jnp.float32, -0.5, 0.5)
    htb = jax.random.uniform(ks[6], (NUM_TREAT, UNITS_EXP), jnp.float32, -0.5, 0.5)
    pw = jax.random.uniform(ks[7], (NUM_TREAT, UNITS_EXP, 1), jnp.float32, -0.5, 0.5)
    pb = jax.random.uniform(ks[8], (NUM_TREAT, 1), jnp.float32, -0.5, 0.5)
    outy = jax.random.uniform(ks[9], (NUM_TREAT + UNITS_EXP, 1), jnp.float32)            # torch.rand

    params = (ek, eow, eob, gk, btreat, htw, htb, pw, pb, outy)

    out, _ = m3e2_forward(x, params)
    out = jax.block_until_ready(out)

    ref = m3e2_reference(x, params)
    assert out.shape == (BATCH, NUM_TREAT + 1)
    assert np.allclose(np.asarray(out), np.asarray(ref), rtol=1e-4, atol=1e-4), \
        "Pallas kernel output does not match JAX reference"
    print("KERNEL_OK")
</pallas_src>

<mosaic_0001>
module attributes {stable_mosaic.version = 11 : i64} {
  func.func @m3e2_kernel(%arg0: i32, %arg1: memref<16x32xf32, #tpu.memory_space<vmem>>, %arg2: memref<72x16xf32, #tpu.memory_space<vmem>>, %arg3: memref<16x4xf32, #tpu.memory_space<vmem>>) attributes {dimension_semantics = [#tpu.dimension_semantics<parallel>], iteration_bounds = array<i64: 1>, scalar_prefetch = 0 : i64, scratch_operands = 0 : i64, tpu.core_type = #tpu.core_type<tc>, window_params = [{transform_indices = @transform_0, window_bounds = array<i64: 16, 32>}, {pipeline_mode = #tpu.pipeline_mode<synchronous>, transform_indices = @transform_1, window_bounds = array<i64: 72, 16>}, {transform_indices = @transform_2, window_bounds = array<i64: 16, 4>}]} {
    %c0 = arith.constant 0 : index
    %c0_0 = arith.constant 0 : index
    %0 = vector.load %arg1[%c0, %c0_0] : memref<16x32xf32, #tpu.memory_space<vmem>>, vector<16x32xf32>
    %c0_1 = arith.constant 0 : index
    %c0_2 = arith.constant 0 : index
    %1 = vector.load %arg2[%c0_1, %c0_2] : memref<72x16xf32, #tpu.memory_space<vmem>>, vector<32x16xf32>
    %cst = arith.constant dense<0.000000e+00> : vector<16x16xf32>
    %2 = tpu.matmul %0, %1, %cst {dimension_numbers = #tpu.dot_dimension_numbers<[1], [0], [0], [1], [0, 0, 1, 1], [], []>} : vector<16x32xf32>, vector<32x16xf32>, vector<16x16xf32> -> vector<16x16xf32>
    %c65 = arith.constant 65 : index
    %c0_3 = arith.constant 0 : index
    %3 = vector.load %arg2[%c65, %c0_3] : memref<72x16xf32, #tpu.memory_space<vmem>>, vector<1x4xf32>
    %4 = vector.extract_strided_slice %2 {offsets = [0, 0], sizes = [16, 4], strides = [1, 1]} : vector<16x16xf32> to vector<16x4xf32>
    %5 = vector.broadcast %3 : vector<1x4xf32> to vector<16x4xf32>
    %6 = arith.addf %4, %5 : vector<16x4xf32>
    %cst_4 = arith.constant 0.000000e+00 : f32
    %7 = vector.broadcast %cst_4 : f32 to vector<16x4xf32>
    %8 = arith.maximumf %6, %7 : vector<16x4xf32>
    %9 = vector.extract_strided_slice %2 {offsets = [0, 4], sizes = [16, 12], strides = [1, 1]} : vector<16x16xf32> to vector<16x12xf32>
    %cst_5 = arith.constant dense<0xFF800000> : vector<16xf32>
    %10 = vector.multi_reduction <maximumf>, %9, %cst_5 [1] : vector<16x12xf32> to vector<16xf32>
    %11 = vector.shape_cast %10 : vector<16xf32> to vector<16x1xf32>
    %12 = vector.broadcast %11 : vector<16x1xf32> to vector<16x12xf32>
    %13 = arith.subf %9, %12 : vector<16x12xf32>
    %14 = math.exp %13 : vector<16x12xf32>
    %15 = vector.extract_strided_slice %14 {offsets = [0, 0], sizes = [16, 4], strides = [1, 1]} : vector<16x12xf32> to vector<16x4xf32>
    %cst_6 = arith.constant dense<0.000000e+00> : vector<16xf32>
    %16 = vector.multi_reduction <add>, %15, %cst_6 [1] : vector<16x4xf32> to vector<16xf32>
    %17 = vector.shape_cast %16 : vector<16xf32> to vector<16x1xf32>
    %18 = vector.broadcast %17 : vector<16x1xf32> to vector<16x4xf32>
    %19 = arith.divf %15, %18 : vector<16x4xf32>
    %20 = arith.mulf %19, %8 : vector<16x4xf32>
    %21 = vector.extract_strided_slice %14 {offsets = [0, 4], sizes = [16, 4], strides = [1, 1]} : vector<16x12xf32> to vector<16x4xf32>
    %cst_7 = arith.constant dense<0.000000e+00> : vector<16xf32>
    %22 = vector.multi_reduction <add>, %21, %cst_7 [1] : vector<16x4xf32> to vector<16xf32>
    %23 = vector.shape_cast %22 : vector<16xf32> to vector<16x1xf32>
    %24 = vector.broadcast %23 : vector<16x1xf32> to vector<16x4xf32>
    %25 = arith.divf %21, %24 : vector<16x4xf32>
    %26 = arith.mulf %25, %8 : vector<16x4xf32>
    %27 = vector.extract_strided_slice %14 {offsets = [0, 8], sizes = [16, 4], strides = [1, 1]} : vector<16x12xf32> to vector<16x4xf32>
    %cst_8 = arith.constant dense<0.000000e+00> : vector<16xf32>
    %28 = vector.multi_reduction <add>, %27, %cst_8 [1] : vector<16x4xf32> to vector<16xf32>
    %29 = vector.shape_cast %28 : vector<16xf32> to vector<16x1xf32>
    %30 = vector.broadcast %29 : vector<16x1xf32> to vector<16x4xf32>
    %31 = arith.divf %27, %30 : vector<16x4xf32>
    %32 = arith.mulf %31, %8 : vector<16x4xf32>
    %33 = tpu.concatenate %20, %26, %32 in 1 : vector<16x4xf32>, vector<16x4xf32>, vector<16x4xf32> -> vector<16x12xf32>
    %c32 = arith.constant 32 : index
    %c0_9 = arith.constant 0 : index
    %34 = vector.load %arg2[%c32, %c0_9] : memref<72x16xf32, #tpu.memory_space<vmem>>, vector<12x16xf32>
    %c64 = arith.constant 64 : index
    %c0_10 = arith.constant 0 : index
    %35 = vector.load %arg2[%c64, %c0_10] : memref<72x16xf32, #tpu.memory_space<vmem>>, vector<1x16xf32>
    %cst_11 = arith.constant dense<0.000000e+00> : vector<16x16xf32>
    %36 = tpu.matmul %33, %34, %cst_11 {dimension_numbers = #tpu.dot_dimension_numbers<[1], [0], [0], [1], [0, 0, 1, 1], [], []>} : vector<16x12xf32>, vector<12x16xf32>, vector<16x16xf32> -> vector<16x16xf32>
    %37 = vector.broadcast %35 : vector<1x16xf32> to vector<16x16xf32>
    %38 = arith.addf %36, %37 : vector<16x16xf32>
    %39 = vector.extract_strided_slice %38 {offsets = [0, 0], sizes = [16, 12], strides = [1, 1]} : vector<16x16xf32> to vector<16x12xf32>
    %40 = vector.extract_strided_slice %38 {offsets = [0, 12], sizes = [16, 4], strides = [1, 1]} : vector<16x16xf32> to vector<16x4xf32>
    %41 = math.tanh %39 : vector<16x12xf32>
    %c48 = arith.constant 48 : index
    %c0_12 = arith.constant 0 : index
    %42 = vector.load %arg2[%c48, %c0_12] : memref<72x16xf32, #tpu.memory_space<vmem>>, vector<12x3xf32>
    %c66 = arith.constant 66 : index
    %c0_13 = arith.constant 0 : index
    %43 = vector.load %arg2[%c66, %c0_13] : memref<72x16xf32, #tpu.memory_space<vmem>>, vector<1x3xf32>
    %cst_14 = arith.constant dense<0.000000e+00> : vector<16x3xf32>
    %44 = tpu.matmul %41, %42, %cst_14 {dimension_numbers = #tpu.dot_dimension_numbers<[1], [0], [0], [1], [0, 0, 1, 1], [], []>} : vector<16x12xf32>, vector<12x3xf32>, vector<16x3xf32> -> vector<16x3xf32>
    %45 = vector.broadcast %43 : vector<1x3xf32> to vector<16x3xf32>
    %46 = arith.addf %44, %45 : vector<16x3xf32>
    %c67 = arith.constant 67 : index
    %c0_15 = arith.constant 0 : index
    %47 = vector.load %arg2[%c67, %c0_15] : memref<72x16xf32, #tpu.memory_space<vmem>>, vector<1x3xf32>
    %c68 = arith.constant 68 : index
    %c0_16 = arith.constant 0 : index
    %48 = vector.load %arg2[%c68, %c0_16] : memref<72x16xf32, #tpu.memory_space<vmem>>, vector<1x4xf32>
    %cst_17 = arith.constant 0.000000e+00 : f32
    %49 = vector.broadcast %cst_17 : f32 to vector<16x3xf32>
    %50 = arith.maximumf %46, %49 : vector<16x3xf32>
    %51 = vector.broadcast %47 : vector<1x3xf32> to vector<16x3xf32>
    %52 = arith.mulf %50, %51 : vector<16x3xf32>
    %cst_18 = arith.constant dense<0.000000e+00> : vector<16xf32>
    %53 = vector.multi_reduction <add>, %52, %cst_18 [1] : vector<16x3xf32> to vector<16xf32>
    %54 = vector.shape_cast %53 : vector<16xf32> to vector<16x1xf32>
    %cst_19 = arith.constant 0.000000e+00 : f32
    %55 = vector.broadcast %cst_19 : f32 to vector<16x4xf32>
    %56 = arith.maximumf %40, %55 : vector<16x4xf32>
    %57 = vector.broadcast %48 : vector<1x4xf32> to vector<16x4xf32>
    %58 = arith.mulf %56, %57 : vector<16x4xf32>
    %cst_20 = arith.constant dense<0.000000e+00> : vector<16xf32>
    %59 = vector.multi_reduction <add>, %58, %cst_20 [1] : vector<16x4xf32> to vector<16xf32>
    %60 = vector.shape_cast %59 : vector<16xf32> to vector<16x1xf32>
    %61 = arith.addf %54, %60 : vector<16x1xf32>
    %62 = tpu.concatenate %46, %61 in 1 : vector<16x3xf32>, vector<16x1xf32> -> vector<16x4xf32>
    %c0_21 = arith.constant 0 : index
    %c0_22 = arith.constant 0 : index
    %63 = vector.load %arg3[%c0_21, %c0_22] : memref<16x4xf32, #tpu.memory_space<vmem>>, vector<16x4xf32>
    tpu.vector_store %arg3[%c0_21, %c0_22], %62 {strides = array<i32>} : memref<16x4xf32, #tpu.memory_space<vmem>>, vector<16x4xf32>,
    return
  }
  func.func @transform_0(%arg0: i32) -> (i32, i32) {
    %c0_i32 = arith.constant 0 : i32
    %c0_i32_0 = arith.constant 0 : i32
    return %arg0, %c0_i32 : i32, i32
  }
  func.func @transform_1(%arg0: i32) -> (i32, i32) {
    %c0_i32 = arith.constant 0 : i32
    %c0_i32_0 = arith.constant 0 : i32
    %c0_i32_1 = arith.constant 0 : i32
    return %c0_i32, %c0_i32_0 : i32, i32
  }
  func.func @transform_2(%arg0: i32) -> (i32, i32) {
    %c0_i32 = arith.constant 0 : i32
    %c0_i32_0 = arith.constant 0 : i32
    return %arg0, %c0_i32 : i32, i32
  }
}

</mosaic_0001>

<llo_original>
// kernel: tpu_custom_call.1
$region0: #{tpu_custom_call.1}
  #allocation0 [shape = 'u32[]', space=smem, size = 0x4, offset = 0x4, fixed_abs, tag = 'smem constant byte address 0x4 - core index']
  #allocation1 [shape = 'u32[144,128]{1,0:T(1,128)}', space=vmem, size = 0x12000, scoped, tag = 'internal scratch']
  %s0 = inlined_call_operand.vmem [shape: f32[16,32], index: 0, kind: input, shape index: {}]
  %s1 = inlined_call_operand.vmem [shape: f32[72,16], index: 1, kind: input, shape index: {}]
  %s2 = inlined_call_operand.vmem [shape: f32[16,4], index: 2, kind: output, shape index: {}]
  %s3 = sld [smem:[#allocation0]]
  $region18: #{tpu_custom_call.1} parent=0
    _
  %s5 = ssub.s32 1, %s3
  %s6 = scalar_select 0, %s5, %s3
  // Predicated region
  $region2: #{tpu_custom_call.1} parent=0 // pred_check
    _
  $region3: #{tpu_custom_call.1} parent=0 // pred_check_branch
    %8 = sbr.rel (0) target = $region5
  $region4: #{tpu_custom_call.1} parent=0 // pred_region
    _
  $region5: #{tpu_custom_call.1} parent=0 // pred_fallthru
    _
  // Predicated region
  $region6: #{tpu_custom_call.1} parent=0 // pred_check
    _
  $region7: #{tpu_custom_call.1} parent=0 // pred_check_branch
    %10 = sbr.rel (0) target = $region9
  $region8: #{tpu_custom_call.1} parent=0 // pred_region
    _
  $region9: #{tpu_custom_call.1} parent=0 // pred_fallthru
    _
  %v11 = vld [vmem:[%s0] sm:$0xff]
  %v12 = vld [vmem:[%s0 + $0x8] sm:$0xff]
  %v13 = vld [vmem:[%s1] sm:$0xff]
  %v14 = vld [vmem:[%s1 + $0x8] sm:$0xff]
  %v15 = vld [vmem:[%s1 + $0x10] sm:$0xff]
  %v16 = vld [vmem:[%s1 + $0x18] sm:$0xff]
  %vm17 = vcmask 261120
  %v19 = vsel %vm17, %v11, 0
  %v22 = vsel %vm17, %v12, 0
  %24 = vmatprep.subr.mxu0 0.0
  %25 = vmatpush1.msra.mxu0 0.0
  %26 = vmatprep.subr.mxu0 0.0
  %27 = vmatpush1.msra.mxu0 0.0
  %28 = vmatprep.subr.mxu0 0.0
  %29 = vmatpush1.msra.mxu0 0.0
  %30 = vmatprep.subr.mxu0 0.0
  %31 = vmatpush1.msra.mxu0 0.0
  %32 = vmatprep.subr.mxu0 0.0
  %33 = vmatpush1.msra.mxu0 0.0
  %34 = vmatprep.subr.mxu0 0.0
  %35 = vmatpush1.msra.mxu0 0.0
  %36 = vmatprep.subr.mxu0 0.0
  %37 = vmatpush1.msra.mxu0 0.0
  %38 = vmatprep.subr.mxu0 0.0
  %39 = vmatpush1.msra.mxu0 0.0
  %40 = vmatprep.subr.mxu0 0.0
  %41 = vmatpush1.msra.mxu0 0.0
  %42 = vmatprep.subr.mxu0 0.0
  %43 = vmatpush1.msra.mxu0 0.0
  %44 = vmatprep.subr.mxu0 0.0
  %45 = vmatpush1.msra.mxu0 0.0
  %46 = vmatprep.subr.mxu0 0.0
  %47 = vmatpush1.msra.mxu0 0.0
  %48 = vmatprep.subr.mxu0 0.0
  %49 = vmatpush1.msra.mxu0 %v16
  %50 = vmatprep.subr.mxu0 0.0
  %51 = vmatpush1.msra.mxu0 %v15
  %52 = vmatprep.subr.mxu0 0.0
  %53 = vmatpush1.msra.mxu0 %v14
  %54 = vmatprep.subr.mxu0 0.0
  %55 = vmatpush1.msra.mxu0 %v13
  %56 = vmatprep.subr.mxu0 0.0
  %57 = vmatpush2.msra.mxu0 0.0
  %58 = vmatprep.subr.mxu0 0.0
  %59 = vmatpush2.msra.mxu0 0.0
  %60 = vmatprep.subr.mxu0 0.0
  %61 = vmatpush2.msra.mxu0 0.0
  %62 = vmatprep.subr.mxu0 0.0
  %63 = vmatpush2.msra.mxu0 0.0
  %64 = vmatprep.subr.mxu0 0.0
  %65 = vmatpush2.msra.mxu0 0.0
  %66 = vmatprep.subr.mxu0 0.0
  %67 = vmatpush2.msra.mxu0 0.0
  %68 = vmatprep.subr.mxu0 0.0
  %69 = vmatpush2.msra.mxu0 0.0
  %70 = vmatprep.subr.mxu0 0.0
  %71 = vmatpush2.msra.mxu0 0.0
  %72 = vmatprep.subr.mxu0 0.0
  %73 = vmatpush2.msra.mxu0 0.0
  %74 = vmatprep.subr.mxu0 0.0
  %75 = vmatpush2.msra.mxu0 0.0
  %76 = vmatprep.subr.mxu0 0.0
  %77 = vmatpush2.msra.mxu0 0.0
  %78 = vmatprep.subr.mxu0 0.0
  %79 = vmatpush2.msra.mxu0 0.0
  %80 = vmatprep.subr.mxu0 0.0
  %81 = vmatpush2.msra.mxu0 0.0
  %82 = vmatprep.subr.mxu0 0.0
  %83 = vmatpush2.msra.mxu0 0.0
  %84 = vmatprep.subr.mxu0 0.0
  %85 = vmatpush2.msra.mxu0 0.0
  %86 = vmatprep.subr.mxu0 0.0
  %87 = vmatpush2.msra.mxu0 0.0
  %88 = vmatprep.mubr.f32.mxu0 0.0
  %89 = vmatmul.mubr.f32.gmra.mxu0 %v19
  %v90 = vpop.f32.mrf.mxu0
  %v91 = vadd.f32 0.0, %v90
  %v92 = vpop.f32.mrf.mxu0
  %93 = vmatprep.mubr.f32.mxu0 0.0
  %94 = vmatmul.mubr.f32.gmra.mxu0 %v22
  %v95 = vpop.f32.mrf.mxu0
  %v96 = vadd.f32 0.0, %v95
  %v97 = vpop.f32.mrf.mxu0
  %98 = vdwg.mxu0
  %v99 = vld [vmem:[%s1 + $0x41] sm:$0x1]
  %v100 = vlaneseq
  %v101 = vshrl.u32 %v100, 7
  %v102 = vsub.s32 0, %v101
  %v103 = vrot.slane %v99, %v102
  %v104 = vadd.f32 %v91, %v103
  %v105 = vadd.f32 %v96, %v103
  %v106 = vmax.f32 %v104, 0.0
  %v107 = vmax.f32 %v105, 0.0
  %vm108 = vcmask 130080
  %v109 = vsel %vm108, %v91, -inf
  %110 = vmax.xlane.f32.xlu0 %v109
  %v111 = vpop.xlane.xlu0 %110
  %v112 = vsel %vm108, %v96, -inf
  %113 = vmax.xlane.f32.xlu0 %v112
  %v114 = vpop.xlane.xlu0 %113
  %v115 = vsub.f32 %v91, %v111
  %v116 = vsub.f32 %v96, %v114
  %v117 = vmul.f32 %v115, 1.442695
  %v118 = vpow.pop %v117
  %v119 = vmul.f32 %v116, 1.442695
  %v120 = vpow.pop %v119
  %123 = vrot.lane.b32.xlu0 %v118, 124
  %v124 = vpop.permute.xlu0 %123
  %125 = vrot.lane.b32.xlu0 %v120, 124
  %v126 = vpop.permute.xlu0 %125
  %vm129 = vcmask 31744
  %v130 = vsel %vm129, %v124, 0.0
  %131 = vadd.xlane.f32.xlu0 %v130
  %v132 = vpop.xlane.xlu0 %131
  %v133 = vsel %vm129, %v126, 0.0
  %134 = vadd.xlane.f32.xlu0 %v133
  %v135 = vpop.xlane.xlu0 %134
  %v136 = vrcp.pop %v132
  %v137 = vmul.f32 %v118, %v136
  %v138 = vrcp.pop %v135
  %v139 = vmul.f32 %v120, %v138
  %142 = vrot.lane.b32.xlu0 %v106, 4
  %v143 = vpop.permute.xlu0 %142
  %144 = vrot.lane.b32.xlu0 %v107, 4
  %v145 = vpop.permute.xlu0 %144
  %v148 = vmul.f32 %v137, %v143
  %v149 = vmul.f32 %v139, %v145
  %150 = vrot.lane.b32.xlu0 %v118, 120
  %v151 = vpop.permute.xlu0 %150
  %152 = vrot.lane.b32.xlu0 %v120, 120
  %v153 = vpop.permute.xlu0 %152
  %v156 = vsel %vm129, %v151, 0.0
  %157 = vadd.xlane.f32.xlu0 %v156
  %v158 = vpop.xlane.xlu0 %157
  %v159 = vsel %vm129, %v153, 0.0
  %160 = vadd.xlane.f32.xlu0 %v159
  %v161 = vpop.xlane.xlu0 %160
  %v162 = vrcp.pop %v158
  %v163 = vmul.f32 %v118, %v162
  %v164 = vrcp.pop %v161
  %v165 = vmul.f32 %v120, %v164
  %166 = vrot.lane.b32.xlu0 %v106, 8
  %v167 = vpop.permute.xlu0 %166
  %168 = vrot.lane.b32.xlu0 %v107, 8
  %v169 = vpop.permute.xlu0 %168
  %v172 = vmul.f32 %v163, %v167
  %v173 = vmul.f32 %v165, %v169
  %174 = vrot.lane.b32.xlu0 %v118, 116
  %v175 = vpop.permute.xlu0 %174
  %176 = vrot.lane.b32.xlu0 %v120, 116
  %v177 = vpop.permute.xlu0 %176
  %v180 = vsel %vm129, %v175, 0.0
  %181 = vadd.xlane.f32.xlu0 %v180
  %v182 = vpop.xlane.xlu0 %181
  %v183 = vsel %vm129, %v177, 0.0
  %184 = vadd.xlane.f32.xlu0 %v183
  %v185 = vpop.xlane.xlu0 %184
  %v186 = vrcp.pop %v182
  %v187 = vmul.f32 %v118, %v186
  %v188 = vrcp.pop %v185
  %v189 = vmul.f32 %v120, %v188
  %190 = vrot.lane.b32.xlu0 %v106, 12
  %v191 = vpop.permute.xlu0 %190
  %192 = vrot.lane.b32.xlu0 %v107, 12
  %v193 = vpop.permute.xlu0 %192
  %v196 = vmul.f32 %v187, %v191
  %v197 = vmul.f32 %v189, %v193
  %200 = vrot.lane.b32.xlu0 %v148, 124
  %v201 = vpop.permute.xlu0 %200
  %202 = vrot.lane.b32.xlu0 %v149, 124
  %v203 = vpop.permute.xlu0 %202
  %208 = vrot.lane.b32.xlu0 %v172, 124
  %v209 = vpop.permute.xlu0 %208
  %210 = vrot.lane.b32.xlu0 %v173, 124
  %v211 = vpop.permute.xlu0 %210
  %216 = vrot.lane.b32.xlu0 %v196, 124
  %v217 = vpop.permute.xlu0 %216
  %218 = vrot.lane.b32.xlu0 %v197, 124
  %v219 = vpop.permute.xlu0 %218
  %v222 = vsel %vm129, %v201, %v209
  %v223 = vsel %vm129, %v203, %v211
  %vm224 = vcmask 64512
  %v225 = vsel %vm224, %v222, %v217
  %v226 = vsel %vm224, %v223, %v219
  %v227 = vld [vmem:[%s1 + $0x20] sm:$0xff]
  %v228 = vld [vmem:[%s1 + $0x28] sm:$0xf]
  %v229 = vld [vmem:[%s1 + $0x40] sm:$0x1]
  %v230 = vlaneseq
  %v231 = vshrl.u32 %v230, 7
  %v232 = vsub.s32 0, %v231
  %v233 = vrot.slane %v229, %v232
  %vm234 = vcmask 97280
  %v236 = vsel %vm234, %v225, 0
  %v239 = vsel %vm234, %v226, 0
  %vm241 = vcmask 1043456
  %v243 = vsel %vm241, %v228, 0
  %245 = vmatprep.subr.mxu0 0.0
  %246 = vmatpush1.msra.mxu0 0.0
  %247 = vmatprep.subr.mxu0 0.0
  %248 = vmatpush1.msra.mxu0 0.0
  %249 = vmatprep.subr.mxu0 0.0
  %250 = vmatpush1.msra.mxu0 0.0
  %251 = vmatprep.subr.mxu0 0.0
  %252 = vmatpush1.msra.mxu0 0.0
  %253 = vmatprep.subr.mxu0 0.0
  %254 = vmatpush1.msra.mxu0 0.0
  %255 = vmatprep.subr.mxu0 0.0
  %256 = vmatpush1.msra.mxu0 0.0
  %257 = vmatprep.subr.mxu0 0.0
  %258 = vmatpush1.msra.mxu0 0.0
  %259 = vmatprep.subr.mxu0 0.0
  %260 = vmatpush1.msra.mxu0 0.0
  %261 = vmatprep.subr.mxu0 0.0
  %262 = vmatpush1.msra.mxu0 0.0
  %263 = vmatprep.subr.mxu0 0.0
  %264 = vmatpush1.msra.mxu0 0.0
  %265 = vmatprep.subr.mxu0 0.0
  %266 = vmatpush1.msra.mxu0 0.0
  %267 = vmatprep.subr.mxu0 0.0
  %268 = vmatpush1.msra.mxu0 0.0
  %269 = vmatprep.subr.mxu0 0.0
  %270 = vmatpush1.msra.mxu0 0.0
  %271 = vmatprep.subr.mxu0 0.0
  %272 = vmatpush1.msra.mxu0 0.0
  %273 = vmatprep.subr.mxu0 0.0
  %274 = vmatpush1.msra.mxu0 %v243
  %275 = vmatprep.subr.mxu0 0.0
  %276 = vmatpush1.msra.mxu0 %v227
  %277 = vmatprep.subr.mxu0 0.0
  %278 = vmatpush2.msra.mxu0 0.0
  %279 = vmatprep.subr.mxu0 0.0
  %280 = vmatpush2.msra.mxu0 0.0
  %281 = vmatprep.subr.mxu0 0.0
  %282 = vmatpush2.msra.mxu0 0.0
  %283 = vmatprep.subr.mxu0 0.0
  %284 = vmatpush2.msra.mxu0 0.0
  %285 = vmatprep.subr.mxu0 0.0
  %286 = vmatpush2.msra.mxu0 0.0
  %287 = vmatprep.subr.mxu0 0.0
  %288 = vmatpush2.msra.mxu0 0.0
  %289 = vmatprep.subr.mxu0 0.0
  %290 = vmatpush2.msra.mxu0 0.0
  %291 = vmatprep.subr.mxu0 0.0
  %292 = vmatpush2.msra.mxu0 0.0
  %293 = vmatprep.subr.mxu0 0.0
  %294 = vmatpush2.msra.mxu0 0.0
  %295 = vmatprep.subr.mxu0 0.0
  %296 = vmatpush2.msra.mxu0 0.0
  %297 = vmatprep.subr.mxu0 0.0
  %298 = vmatpush2.msra.mxu0 0.0
  %299 = vmatprep.subr.mxu0 0.0
  %300 = vmatpush2.msra.mxu0 0.0
  %301 = vmatprep.subr.mxu0 0.0
  %302 = vmatpush2.msra.mxu0 0.0
  %303 = vmatprep.subr.mxu0 0.0
  %304 = vmatpush2.msra.mxu0 0.0
  %305 = vmatprep.subr.mxu0 0.0
  %306 = vmatpush2.msra.mxu0 0.0
  %307 = vmatprep.subr.mxu0 0.0
  %308 = vmatpush2.msra.mxu0 0.0
  %309 = vmatprep.mubr.f32.mxu0 0.0
  %310 = vmatmul.mubr.f32.gmra.mxu0 %v236
  %v311 = vpop.f32.mrf.mxu0
  %v312 = vadd.f32 %v233, %v311
  %v313 = vpop.f32.mrf.mxu0
  %314 = vmatprep.mubr.f32.mxu0 0.0
  %315 = vmatmul.mubr.f32.gmra.mxu0 %v239
  %v316 = vpop.f32.mrf.mxu0
  %v317 = vadd.f32 %v233, %v316
  %v318 = vpop.f32.mrf.mxu0
  %319 = vdwg.mxu0
  %v320 = vtanh.pop %v312
  %v321 = vtanh.pop %v317
  %v322 = vld [vmem:[%s1 + $0x30] sm:$0xff]
  %v323 = vld [vmem:[%s1 + $0x38] sm:$0xf]
  %v324 = vld [vmem:[%s1 + $0x42] sm:$0x1]
  %v325 = vlaneseq
  %v326 = vshrl.u32 %v325, 7
  %v327 = vsub.s32 0, %v326
  %v328 = vrot.slane %v324, %v327
  %v330 = vsel %vm234, %v320, 0
  %v333 = vsel %vm234, %v321, 0
  %v336 = vsel %vm241, %v323, 0
  %338 = vmatprep.subr.mxu0 0.0
  %339 = vmatpush1.msra.mxu0 0.0
  %340 = vmatprep.subr.mxu0 0.0
  %341 = vmatpush1.msra.mxu0 0.0
  %342 = vmatprep.subr.mxu0 0.0
  %343 = vmatpush1.msra.mxu0 0.0
  %344 = vmatprep.subr.mxu0 0.0
  %345 = vmatpush1.msra.mxu0 0.0
  %346 = vmatprep.subr.mxu0 0.0
  %347 = vmatpush1.msra.mxu0 0.0
  %348 = vmatprep.subr.mxu0 0.0
  %349 = vmatpush1.msra.mxu0 0.0
  %350 = vmatprep.subr.mxu0 0.0
  %351 = vmatpush1.msra.mxu0 0.0
  %352 = vmatprep.subr.mxu0 0.0
  %353 = vmatpush1.msra.mxu0 0.0
  %354 = vmatprep.subr.mxu0 0.0
  %355 = vmatpush1.msra.mxu0 0.0
  %356 = vmatprep.subr.mxu0 0.0
  %357 = vmatpush1.msra.mxu0 0.0
  %358 = vmatprep.subr.mxu0 0.0
  %359 = vmatpush1.msra.mxu0 0.0
  %360 = vmatprep.subr.mxu0 0.0
  %361 = vmatpush1.msra.mxu0 0.0
  %362 = vmatprep.subr.mxu0 0.0
  %363 = vmatpush1.msra.mxu0 0.0
  %364 = vmatprep.subr.mxu0 0.0
  %365 = vmatpush1.msra.mxu0 0.0
  %366 = vmatprep.subr.mxu0 0.0
  %367 = vmatpush1.msra.mxu0 %v336
  %368 = vmatprep.subr.mxu0 0.0
  %369 = vmatpush1.msra.mxu0 %v322
  %370 = vmatprep.subr.mxu0 0.0
  %371 = vmatpush2.msra.mxu0 0.0
  %372 = vmatprep.subr.mxu0 0.0
  %373 = vmatpush2.msra.mxu0 0.0
  %374 = vmatprep.subr.mxu0 0.0
  %375 = vmatpush2.msra.mxu0 0.0
  %376 = vmatprep.subr.mxu0 0.0
  %377 = vmatpush2.msra.mxu0 0.0
  %378 = vmatprep.subr.mxu0 0.0
  %379 = vmatpush2.msra.mxu0 0.0
  %380 = vmatprep.subr.mxu0 0.0
  %381 = vmatpush2.msra.mxu0 0.0
  %382 = vmatprep.subr.mxu0 0.0
  %383 = vmatpush2.msra.mxu0 0.0
  %384 = vmatprep.subr.mxu0 0.0
  %385 = vmatpush2.msra.mxu0 0.0
  %386 = vmatprep.subr.mxu0 0.0
  %387 = vmatpush2.msra.mxu0 0.0
  %388 = vmatprep.subr.mxu0 0.0
  %389 = vmatpush2.msra.mxu0 0.0
  %390 = vmatprep.subr.mxu0 0.0
  %391 = vmatpush2.msra.mxu0 0.0
  %392 = vmatprep.subr.mxu0 0.0
  %393 = vmatpush2.msra.mxu0 0.0
  %394 = vmatprep.subr.mxu0 0.0
  %395 = vmatpush2.msra.mxu0 0.0
  %396 = vmatprep.subr.mxu0 0.0
  %397 = vmatpush2.msra.mxu0 0.0
  %398 = vmatprep.subr.mxu0 0.0
  %399 = vmatpush2.msra.mxu0 0.0
  %400 = vmatprep.subr.mxu0 0.0
  %401 = vmatpush2.msra.mxu0 0.0
  %402 = vmatprep.mubr.f32.mxu0 0.0
  %403 = vmatmul.mubr.f32.gmra.mxu0 %v330
  %v404 = vpop.f32.mrf.mxu0
  %v405 = vadd.f32 %v328, %v404
  %v406 = vpop.f32.mrf.mxu0
  %407 = vmatprep.mubr.f32.mxu0 0.0
  %408 = vmatmul.mubr.f32.gmra.mxu0 %v333
  %v409 = vpop.f32.mrf.mxu0
  %v410 = vadd.f32 %v328, %v409
  %v411 = vpop.f32.mrf.mxu0
  %412 = vdwg.mxu0
  %v413 = vld [vmem:[%s1 + $0x43] sm:$0x1]
  %v414 = vld [vmem:[%s1 + $0x44] sm:$0x1]
  %v415 = vmax.f32 %v405, 0.0
  %v416 = vmax.f32 %v410, 0.0
  %v417 = vlaneseq
  %v418 = vshrl.u32 %v417, 7
  %v419 = vsub.s32 0, %v418
  %v420 = vrot.slane %v413, %v419
  %v421 = vmul.f32 %v415, %v420
  %v422 = vmul.f32 %v416, %v420
  %vm423 = vcmask 23552
  %v424 = vsel %vm423, %v421, 0.0
  %425 = vadd.xlane.f32.xlu0 %v424
  %v426 = vpop.xlane.xlu0 %425
  %v427 = vsel %vm423, %v422, 0.0
  %428 = vadd.xlane.f32.xlu0 %v427
  %v429 = vpop.xlane.xlu0 %428
  %v430 = vmax.f32 %v312, 0.0
  %v431 = vmax.f32 %v317, 0.0
  %v432 = vlaneseq
  %v433 = vshrl.u32 %v432, 7
  %v434 = vsub.s32 0, %v433
  %v435 = vrot.slane %v414, %v434
  %437 = vrot.lane.b32.xlu0 %v435, 12
  %v438 = vpop.permute.xlu0 %437
  %v440 = vmul.f32 %v430, %v438
  %v441 = vmul.f32 %v431, %v438
  %444 = vrot.lane.b32.xlu0 %v440, 116
  %v445 = vpop.permute.xlu0 %444
  %446 = vrot.lane.b32.xlu0 %v441, 116
  %v447 = vpop.permute.xlu0 %446
  %v450 = vsel %vm129, %v445, 0.0
  %451 = vadd.xlane.f32.xlu0 %v450
  %v452 = vpop.xlane.xlu0 %451
  %v453 = vsel %vm129, %v447, 0.0
  %454 = vadd.xlane.f32.xlu0 %v453
  %v455 = vpop.xlane.xlu0 %454
  %v456 = vadd.f32 %v426, %v452
  %v457 = vadd.f32 %v429, %v455
  %v458 = vsel %vm423, %v405, %v456
  %v459 = vsel %vm423, %v410, %v457
  %460 = vst.msk [vmem:[%s2] sm:$0xff] %vm129, %v458
  %461 = vst.msk [vmem:[%s2 + $0x8] sm:$0xff] %vm129, %v459
  // Predicated region
  $region10: #{tpu_custom_call.1} parent=0 // pred_check
    _
  $region11: #{tpu_custom_call.1} parent=0 // pred_check_branch
    %463 = sbr.rel (0) target = $region13
  $region12: #{tpu_custom_call.1} parent=0 // pred_region
    _
  $region13: #{tpu_custom_call.1} parent=0 // pred_fallthru
    _
  // Predicated region
  $region14: #{tpu_custom_call.1} parent=0 // pred_check
    _
  $region15: #{tpu_custom_call.1} parent=0 // pred_check_branch
    %465 = sbr.rel (0) target = $region17
  $region16: #{tpu_custom_call.1} parent=0 // pred_region
    _
  $region17: #{tpu_custom_call.1} parent=0 // pred_fallthru
    _

</llo_original>
